<compile_context>
chip_gen: v7x
topology: tpu7x:2x2x1
jax: 0.10.0
libtpu: 0.0.40
codegen_flags: <defaults>
</compile_context>

<pallas_src>
import functools

import jax
import jax.numpy as jnp
from jax.experimental import pallas as pl
from jax.experimental.pallas import tpu as pltpu

NEG = float("-inf")


def _build_masks(n, width):
    """Validity masks for the shifted reads, built once at (1, n) and broadcast in jnp.where."""
    pos = jax.lax.broadcasted_iota(jnp.int32, (1, n), 1)
    col = pos % width
    # H-direction shifts by +-W / +-2W: only array-end wrap is invalid.
    h_masks = (pos < n - width, pos >= width, pos < n - 2 * width, pos >= 2 * width)
    # W-direction shifts by +-1 / +-2: row-edge crossings (these subsume the array-end wrap).
    w_masks = (col < width - 1, col >= 1, col < width - 2, col >= 2)
    return h_masks, w_masks


def _pool5_flat(a, *, width, use_roll, fill, h_masks, w_masks):
    """Separable 5x5, stride-1, -inf-padded max pool on a (Cb, H*W) flattened plane."""
    n = a.shape[-1]

    def fwd(v, s, mask, mask_needed):
        # result[i] = v[i + s] where valid, else -inf.
        if s >= n:
            return None  # entire shifted plane is padding -> contributes nothing
        if use_roll:
            return jnp.where(mask, pltpu.roll(v, (-s) % n, axis=1), NEG)  # XLU lane rotate
        sh = jnp.concatenate([v[:, s:], fill[:, :s]], axis=1)
        return jnp.where(mask, sh, NEG) if mask_needed else sh

    def bwd(v, s, mask, mask_needed):
        # result[i] = v[i - s] where valid, else -inf.
        if s >= n:
            return None
        if use_roll:
            return jnp.where(mask, pltpu.roll(v, s, axis=1), NEG)
        sh = jnp.concatenate([fill[:, :s], v[:, : n - s]], axis=1)
        return jnp.where(mask, sh, NEG) if mask_needed else sh

    def acc(cur, term):
        return cur if term is None else jnp.maximum(cur, term)

    hf1, hb1, hf2, hb2 = h_masks
    wf1, wb1, wf2, wb2 = w_masks
    # H pass: shifts by +-W, +-2W.
    m = a
    m = acc(m, fwd(a, width, hf1, False))
    m = acc(m, bwd(a, width, hb1, False))
    m = acc(m, fwd(a, 2 * width, hf2, False))
    m = acc(m, bwd(a, 2 * width, hb2, False))
    # W pass: shifts by +-1, +-2 with row-edge masks.
    r = m
    r = acc(r, fwd(m, 1, wf1, True))
    r = acc(r, bwd(m, 1, wb1, True))
    r = acc(r, fwd(m, 2, wf2, True))
    r = acc(r, bwd(m, 2, wb2, True))
    return r


def _spp_kernel(x_ref, out_ref, *, width, use_roll):
    cb, n = x_ref.shape
    x = x_ref[...]                                   # (Cb, H*W) lane-dense block
    out_ref[3] = x                                   # early store: pass-through branch
    h_masks, w_masks = _build_masks(n, width)        # (1, n) bools, hoisted once
    fill = None if use_roll else jnp.full((cb, min(2 * width, n)), NEG, x.dtype)
    pool = functools.partial(_pool5_flat, width=width, use_roll=use_roll,
                             fill=fill, h_masks=h_masks, w_masks=w_masks)
    p5 = pool(x)                                     # 5x5 window
    out_ref[2] = p5
    p9 = pool(p5)                                    # == 9x9 window
    out_ref[1] = p9
    p13 = pool(p9)                                   # == 13x13 window
    out_ref[0] = p13


def _pick_channel_block(B, C, N, dtype):
    """Channel block: dtype-aligned divisor of C, fits VMEM (incl. temps), >= 4 grid steps."""
    itemsize = jnp.dtype(dtype).itemsize
    align = max(8, 32 // itemsize)                   # f32 -> 8, bf16 -> 16, int8/fp8 -> 32
    cands = [d for d in range(align, C + 1, align) if C % d == 0]
    if not cands:
        return C                                     # full-extent channel block (valid BlockSpec)
    live = 18            # 10 pipelined buffers (1 in + 4 out, double-buffered) + ~8 in-body temps
    budget = 20 << 20    # comfortably inside v7x's 64 MiB / default scoped 32 MiB
    min_steps = 4        # pipeline overlap + both TCs on v7x
    fits = [d for d in cands if d * N * itemsize * live <= budget]
    if not fits:
        return min(cands)
    # Prefer hitting min_steps grid steps, then the largest block.
    return max(fits, key=lambda d: (min(B * (C // d), min_steps), d))


@functools.partial(jax.jit, static_argnames=("channel_block",))
def spp(x, *, channel_block=None):
    """x: (B, C, H, W) float -> (B, 4C, H, W), matching torch.cat((p13, p9, p5, x), dim=1)."""
    B, C, H, W = x.shape
    N = H * W
    xf = x.reshape(B, C, N)                          # metadata-only (contiguous NCHW)
    if channel_block is not None:
        cb = channel_block
        if cb != C and (C % cb != 0 or cb % 8 != 0):
            raise ValueError(f"channel_block={cb} must equal C or divide C and be a multiple of 8")
    else:
        cb = _pick_channel_block(B, C, N, x.dtype)
    use_roll = (N % 128 == 0)                        # lane-aligned -> XLU rolls; else concat path
    block_bytes = cb * N * x.dtype.itemsize
    vmem_limit = int(min(64 << 20, max(32 << 20, 2 * 18 * block_bytes)))
    kernel = functools.partial(_spp_kernel, width=W, use_roll=use_roll)
    out = pl.pallas_call(
        kernel,
        out_shape=jax.ShapeDtypeStruct((B, 4, C, N), x.dtype),
        grid_spec=pltpu.PrefetchScalarGridSpec(
            num_scalar_prefetch=0,
            grid=(B, C // cb),
            in_specs=[pl.BlockSpec((pl.Squeezed(), cb, N), lambda b, c: (b, c, 0))],
            out_specs=pl.BlockSpec((pl.Squeezed(), 4, cb, N), lambda b, c: (b, 0, c, 0)),
        ),
        compiler_params=pltpu.CompilerParams(
            dimension_semantics=("parallel", "parallel"),
            vmem_limit_bytes=vmem_limit),
    )(xf)
    # (B, 4, C, N) -> (B, 4C, H, W): pure metadata reshape, preserves torch.cat order.
    return out.reshape(B, 4 * C, H, W)


# ---------------- reference (for self-test) ----------------

def _ref_pool(x, k):
    p = k // 2
    return jax.lax.reduce_window(
        x, -jnp.inf, jax.lax.max,
        window_dimensions=(1, 1, k, k),
        window_strides=(1, 1, 1, 1),
        padding=[(0, 0), (0, 0), (p, p), (p, p)])


def _ref_spp(x):
    return jnp.concatenate(
        [_ref_pool(x, 13), _ref_pool(x, 9), _ref_pool(x, 5), x], axis=1)


if __name__ == "__main__":
    key = jax.random.PRNGKey(0)

    # Small shape consistent with the module: lane-aligned spatial (16x16 -> N=256),
    # exercises the pltpu.roll (XLU) path.
    B, C, H, W = 2, 8, 16, 16
    x = jax.random.normal(key, (B, C, H, W), dtype=jnp.float32)
    out = jax.block_until_ready(spp(x))
    assert out.shape == (B, 4 * C, H, W), out.shape
    assert jnp.allclose(out, _ref_spp(x)), "mismatch vs reduce_window reference (16x16)"

    # YOLO-like odd spatial size (13x13, N=169 not lane-aligned) + multi-channel-block grid:
    # exercises the slice+concat fallback path with Cb < C.
    x2 = jax.random.normal(jax.random.PRNGKey(1), (1, 16, 13, 13), dtype=jnp.float32)
    out2 = jax.block_until_ready(spp(x2, channel_block=8))
    assert out2.shape == (1, 64, 13, 13), out2.shape
    assert jnp.allclose(out2, _ref_spp(x2)), "mismatch vs reduce_window reference (13x13)"

    print("KERNEL_OK")
</pallas_src>

<mosaic_0001>
module attributes {stable_mosaic.version = 11 : i64} {
  func.func @_spp_kernel(%arg0: i32, %arg1: i32, %arg2: memref<1x8x256xf32, #tpu.memory_space<vmem>>, %arg3: memref<1x4x8x256xf32, #tpu.memory_space<vmem>>) attributes {dimension_semantics = [#tpu.dimension_semantics<parallel>, #tpu.dimension_semantics<parallel>], iteration_bounds = array<i64: 2, 1>, scalar_prefetch = 0 : i64, scratch_operands = 0 : i64, tpu.core_type = #tpu.core_type<tc>, window_params = [{transform_indices = @transform_0, window_bounds = array<i64: 1, 8, 256>}, {transform_indices = @transform_1, window_bounds = array<i64: 1, 4, 8, 256>}]} {
    %c0 = arith.constant 0 : index
    %c0_0 = arith.constant 0 : index
    %c0_1 = arith.constant 0 : index
    %0 = vector.load %arg2[%c0, %c0_0, %c0_1] : memref<1x8x256xf32, #tpu.memory_space<vmem>>, vector<1x8x256xf32>
    %1 = vector.shape_cast %0 : vector<1x8x256xf32> to vector<8x256xf32>
    %c0_2 = arith.constant 0 : index
    %c3 = arith.constant 3 : index
    %c0_3 = arith.constant 0 : index
    %c0_4 = arith.constant 0 : index
    %2 = vector.load %arg3[%c0_2, %c3, %c0_3, %c0_4] : memref<1x4x8x256xf32, #tpu.memory_space<vmem>>, vector<1x1x8x256xf32>
    %3 = vector.shape_cast %2 : vector<1x1x8x256xf32> to vector<8x256xf32>
    %4 = vector.shape_cast %1 : vector<8x256xf32> to vector<1x1x8x256xf32>
    tpu.vector_store %arg3[%c0_2, %c3, %c0_3, %c0_4], %4 {strides = array<i32>} : memref<1x4x8x256xf32, #tpu.memory_space<vmem>>, vector<1x1x8x256xf32>,
    %5 = tpu.iota {dimensions = array<i32: 1>} : vector<1x256xi32>
    %c16_i32 = arith.constant 16 : i32
    %c0_i32 = arith.constant 0 : i32
    %6 = arith.cmpi eq, %c16_i32, %c0_i32 : i32
    %c1_i32 = arith.constant 1 : i32
    %7 = arith.select %6, %c1_i32, %c16_i32 : i32
    %8 = vector.broadcast %7 : i32 to vector<1x256xi32>
    %9 = arith.remsi %5, %8 : vector<1x256xi32>
    %c0_i32_5 = arith.constant 0 : i32
    %10 = vector.broadcast %c0_i32_5 : i32 to vector<1x256xi32>
    %11 = arith.cmpi ne, %9, %10 : vector<1x256xi32>
    %c0_i32_6 = arith.constant 0 : i32
    %12 = vector.broadcast %c0_i32_6 : i32 to vector<1x256xi32>
    %13 = arith.cmpi slt, %9, %12 : vector<1x256xi32>
    %c0_i32_7 = arith.constant 0 : i32
    %14 = arith.cmpi slt, %7, %c0_i32_7 : i32
    %15 = vector.broadcast %14 : i1 to vector<1x256xi1>
    %16 = vector.broadcast %15 : vector<1x256xi1> to vector<1x256xi1>
    %17 = arith.xori %13, %16 : vector<1x256xi1>
    %18 = arith.andi %17, %11 : vector<1x256xi1>
    %19 = vector.broadcast %7 : i32 to vector<1x256xi32>
    %20 = arith.addi %9, %19 : vector<1x256xi32>
    %21 = arith.select %18, %20, %9 : vector<1x256xi1>, vector<1x256xi32>
    %c240_i32 = arith.constant 240 : i32
    %22 = vector.broadcast %c240_i32 : i32 to vector<1x256xi32>
    %23 = arith.cmpi slt, %5, %22 : vector<1x256xi32>
    %c16_i32_8 = arith.constant 16 : i32
    %24 = vector.broadcast %c16_i32_8 : i32 to vector<1x256xi32>
    %25 = arith.cmpi sge, %5, %24 : vector<1x256xi32>
    %c224_i32 = arith.constant 224 : i32
    %26 = vector.broadcast %c224_i32 : i32 to vector<1x256xi32>
    %27 = arith.cmpi slt, %5, %26 : vector<1x256xi32>
    %c32_i32 = arith.constant 32 : i32
    %28 = vector.broadcast %c32_i32 : i32 to vector<1x256xi32>
    %29 = arith.cmpi sge, %5, %28 : vector<1x256xi32>
    %c15_i32 = arith.constant 15 : i32
    %30 = vector.broadcast %c15_i32 : i32 to vector<1x256xi32>
    %31 = arith.cmpi slt, %21, %30 : vector<1x256xi32>
    %c1_i32_9 = arith.constant 1 : i32
    %32 = vector.broadcast %c1_i32_9 : i32 to vector<1x256xi32>
    %33 = arith.cmpi sge, %21, %32 : vector<1x256xi32>
    %c14_i32 = arith.constant 14 : i32
    %34 = vector.broadcast %c14_i32 : i32 to vector<1x256xi32>
    %35 = arith.cmpi slt, %21, %34 : vector<1x256xi32>
    %c2_i32 = arith.constant 2 : i32
    %36 = vector.broadcast %c2_i32 : i32 to vector<1x256xi32>
    %37 = arith.cmpi sge, %21, %36 : vector<1x256xi32>
    %c240_i32_10 = arith.constant 240 : i32
    %38 = tpu.dynamic_rotate %1 by %c240_i32_10 dim 1 : vector<8x256xf32>, i32 -> vector<8x256xf32>
    %cst = arith.constant 0xFF800000 : f32
    %39 = vector.shape_cast %23 : vector<1x256xi1> to vector<1x256xi1>
    %40 = vector.broadcast %39 : vector<1x256xi1> to vector<8x256xi1>
    %41 = vector.broadcast %cst : f32 to vector<8x256xf32>
    %42 = arith.select %40, %38, %41 : vector<8x256xi1>, vector<8x256xf32>
    %43 = arith.maximumf %1, %42 : vector<8x256xf32>
    %c16_i32_11 = arith.constant 16 : i32
    %44 = tpu.dynamic_rotate %1 by %c16_i32_11 dim 1 : vector<8x256xf32>, i32 -> vector<8x256xf32>
    %cst_12 = arith.constant 0xFF800000 : f32
    %45 = vector.shape_cast %25 : vector<1x256xi1> to vector<1x256xi1>
    %46 = vector.broadcast %45 : vector<1x256xi1> to vector<8x256xi1>
    %47 = vector.broadcast %cst_12 : f32 to vector<8x256xf32>
    %48 = arith.select %46, %44, %47 : vector<8x256xi1>, vector<8x256xf32>
    %49 = arith.maximumf %43, %48 : vector<8x256xf32>
    %c224_i32_13 = arith.constant 224 : i32
    %50 = tpu.dynamic_rotate %1 by %c224_i32_13 dim 1 : vector<8x256xf32>, i32 -> vector<8x256xf32>
    %cst_14 = arith.constant 0xFF800000 : f32
    %51 = vector.shape_cast %27 : vector<1x256xi1> to vector<1x256xi1>
    %52 = vector.broadcast %51 : vector<1x256xi1> to vector<8x256xi1>
    %53 = vector.broadcast %cst_14 : f32 to vector<8x256xf32>
    %54 = arith.select %52, %50, %53 : vector<8x256xi1>, vector<8x256xf32>
    %55 = arith.maximumf %49, %54 : vector<8x256xf32>
    %c32_i32_15 = arith.constant 32 : i32
    %56 = tpu.dynamic_rotate %1 by %c32_i32_15 dim 1 : vector<8x256xf32>, i32 -> vector<8x256xf32>
    %cst_16 = arith.constant 0xFF800000 : f32
    %57 = vector.shape_cast %29 : vector<1x256xi1> to vector<1x256xi1>
    %58 = vector.broadcast %57 : vector<1x256xi1> to vector<8x256xi1>
    %59 = vector.broadcast %cst_16 : f32 to vector<8x256xf32>
    %60 = arith.select %58, %56, %59 : vector<8x256xi1>, vector<8x256xf32>
    %61 = arith.maximumf %55, %60 : vector<8x256xf32>
    %c255_i32 = arith.constant 255 : i32
    %62 = tpu.dynamic_rotate %61 by %c255_i32 dim 1 : vector<8x256xf32>, i32 -> vector<8x256xf32>
    %cst_17 = arith.constant 0xFF800000 : f32
    %63 = vector.shape_cast %31 : vector<1x256xi1> to vector<1x256xi1>
    %64 = vector.broadcast %63 : vector<1x256xi1> to vector<8x256xi1>
    %65 = vector.broadcast %cst_17 : f32 to vector<8x256xf32>
    %66 = arith.select %64, %62, %65 : vector<8x256xi1>, vector<8x256xf32>
    %67 = arith.maximumf %61, %66 : vector<8x256xf32>
    %c1_i32_18 = arith.constant 1 : i32
    %68 = tpu.dynamic_rotate %61 by %c1_i32_18 dim 1 : vector<8x256xf32>, i32 -> vector<8x256xf32>
    %cst_19 = arith.constant 0xFF800000 : f32
    %69 = vector.shape_cast %33 : vector<1x256xi1> to vector<1x256xi1>
    %70 = vector.broadcast %69 : vector<1x256xi1> to vector<8x256xi1>
    %71 = vector.broadcast %cst_19 : f32 to vector<8x256xf32>
    %72 = arith.select %70, %68, %71 : vector<8x256xi1>, vector<8x256xf32>
    %73 = arith.maximumf %67, %72 : vector<8x256xf32>
    %c254_i32 = arith.constant 254 : i32
    %74 = tpu.dynamic_rotate %61 by %c254_i32 dim 1 : vector<8x256xf32>, i32 -> vector<8x256xf32>
    %cst_20 = arith.constant 0xFF800000 : f32
    %75 = vector.shape_cast %35 : vector<1x256xi1> to vector<1x256xi1>
    %76 = vector.broadcast %75 : vector<1x256xi1> to vector<8x256xi1>
    %77 = vector.broadcast %cst_20 : f32 to vector<8x256xf32>
    %78 = arith.select %76, %74, %77 : vector<8x256xi1>, vector<8x256xf32>
    %79 = arith.maximumf %73, %78 : vector<8x256xf32>
    %c2_i32_21 = arith.constant 2 : i32
    %80 = tpu.dynamic_rotate %61 by %c2_i32_21 dim 1 : vector<8x256xf32>, i32 -> vector<8x256xf32>
    %cst_22 = arith.constant 0xFF800000 : f32
    %81 = vector.shape_cast %37 : vector<1x256xi1> to vector<1x256xi1>
    %82 = vector.broadcast %81 : vector<1x256xi1> to vector<8x256xi1>
    %83 = vector.broadcast %cst_22 : f32 to vector<8x256xf32>
    %84 = arith.select %82, %80, %83 : vector<8x256xi1>, vector<8x256xf32>
    %85 = arith.maximumf %79, %84 : vector<8x256xf32>
    %c0_23 = arith.constant 0 : index
    %c2 = arith.constant 2 : index
    %c0_24 = arith.constant 0 : index
    %c0_25 = arith.constant 0 : index
    %86 = vector.load %arg3[%c0_23, %c2, %c0_24, %c0_25] : memref<1x4x8x256xf32, #tpu.memory_space<vmem>>, vector<1x1x8x256xf32>
    %87 = vector.shape_cast %86 : vector<1x1x8x256xf32> to vector<8x256xf32>
    %88 = vector.shape_cast %85 : vector<8x256xf32> to vector<1x1x8x256xf32>
    tpu.vector_store %arg3[%c0_23, %c2, %c0_24, %c0_25], %88 {strides = array<i32>} : memref<1x4x8x256xf32, #tpu.memory_space<vmem>>, vector<1x1x8x256xf32>,
    %c240_i32_26 = arith.constant 240 : i32
    %89 = tpu.dynamic_rotate %85 by %c240_i32_26 dim 1 : vector<8x256xf32>, i32 -> vector<8x256xf32>
    %cst_27 = arith.constant 0xFF800000 : f32
    %90 = vector.shape_cast %23 : vector<1x256xi1> to vector<1x256xi1>
    %91 = vector.broadcast %90 : vector<1x256xi1> to vector<8x256xi1>
    %92 = vector.broadcast %cst_27 : f32 to vector<8x256xf32>
    %93 = arith.select %91, %89, %92 : vector<8x256xi1>, vector<8x256xf32>
    %94 = arith.maximumf %85, %93 : vector<8x256xf32>
    %c16_i32_28 = arith.constant 16 : i32
    %95 = tpu.dynamic_rotate %85 by %c16_i32_28 dim 1 : vector<8x256xf32>, i32 -> vector<8x256xf32>
    %cst_29 = arith.constant 0xFF800000 : f32
    %96 = vector.shape_cast %25 : vector<1x256xi1> to vector<1x256xi1>
    %97 = vector.broadcast %96 : vector<1x256xi1> to vector<8x256xi1>
    %98 = vector.broadcast %cst_29 : f32 to vector<8x256xf32>
    %99 = arith.select %97, %95, %98 : vector<8x256xi1>, vector<8x256xf32>
    %100 = arith.maximumf %94, %99 : vector<8x256xf32>
    %c224_i32_30 = arith.constant 224 : i32
    %101 = tpu.dynamic_rotate %85 by %c224_i32_30 dim 1 : vector<8x256xf32>, i32 -> vector<8x256xf32>
    %cst_31 = arith.constant 0xFF800000 : f32
    %102 = vector.shape_cast %27 : vector<1x256xi1> to vector<1x256xi1>
    %103 = vector.broadcast %102 : vector<1x256xi1> to vector<8x256xi1>
    %104 = vector.broadcast %cst_31 : f32 to vector<8x256xf32>
    %105 = arith.select %103, %101, %104 : vector<8x256xi1>, vector<8x256xf32>
    %106 = arith.maximumf %100, %105 : vector<8x256xf32>
    %c32_i32_32 = arith.constant 32 : i32
    %107 = tpu.dynamic_rotate %85 by %c32_i32_32 dim 1 : vector<8x256xf32>, i32 -> vector<8x256xf32>
    %cst_33 = arith.constant 0xFF800000 : f32
    %108 = vector.shape_cast %29 : vector<1x256xi1> to vector<1x256xi1>
    %109 = vector.broadcast %108 : vector<1x256xi1> to vector<8x256xi1>
    %110 = vector.broadcast %cst_33 : f32 to vector<8x256xf32>
    %111 = arith.select %109, %107, %110 : vector<8x256xi1>, vector<8x256xf32>
    %112 = arith.maximumf %106, %111 : vector<8x256xf32>
    %c255_i32_34 = arith.constant 255 : i32
    %113 = tpu.dynamic_rotate %112 by %c255_i32_34 dim 1 : vector<8x256xf32>, i32 -> vector<8x256xf32>
    %cst_35 = arith.constant 0xFF800000 : f32
    %114 = vector.shape_cast %31 : vector<1x256xi1> to vector<1x256xi1>
    %115 = vector.broadcast %114 : vector<1x256xi1> to vector<8x256xi1>
    %116 = vector.broadcast %cst_35 : f32 to vector<8x256xf32>
    %117 = arith.select %115, %113, %116 : vector<8x256xi1>, vector<8x256xf32>
    %118 = arith.maximumf %112, %117 : vector<8x256xf32>
    %c1_i32_36 = arith.constant 1 : i32
    %119 = tpu.dynamic_rotate %112 by %c1_i32_36 dim 1 : vector<8x256xf32>, i32 -> vector<8x256xf32>
    %cst_37 = arith.constant 0xFF800000 : f32
    %120 = vector.shape_cast %33 : vector<1x256xi1> to vector<1x256xi1>
    %121 = vector.broadcast %120 : vector<1x256xi1> to vector<8x256xi1>
    %122 = vector.broadcast %cst_37 : f32 to vector<8x256xf32>
    %123 = arith.select %121, %119, %122 : vector<8x256xi1>, vector<8x256xf32>
    %124 = arith.maximumf %118, %123 : vector<8x256xf32>
    %c254_i32_38 = arith.constant 254 : i32
    %125 = tpu.dynamic_rotate %112 by %c254_i32_38 dim 1 : vector<8x256xf32>, i32 -> vector<8x256xf32>
    %cst_39 = arith.constant 0xFF800000 : f32
    %126 = vector.shape_cast %35 : vector<1x256xi1> to vector<1x256xi1>
    %127 = vector.broadcast %126 : vector<1x256xi1> to vector<8x256xi1>
    %128 = vector.broadcast %cst_39 : f32 to vector<8x256xf32>
    %129 = arith.select %127, %125, %128 : vector<8x256xi1>, vector<8x256xf32>
    %130 = arith.maximumf %124, %129 : vector<8x256xf32>
    %c2_i32_40 = arith.constant 2 : i32
    %131 = tpu.dynamic_rotate %112 by %c2_i32_40 dim 1 : vector<8x256xf32>, i32 -> vector<8x256xf32>
    %cst_41 = arith.constant 0xFF800000 : f32
    %132 = vector.shape_cast %37 : vector<1x256xi1> to vector<1x256xi1>
    %133 = vector.broadcast %132 : vector<1x256xi1> to vector<8x256xi1>
    %134 = vector.broadcast %cst_41 : f32 to vector<8x256xf32>
    %135 = arith.select %133, %131, %134 : vector<8x256xi1>, vector<8x256xf32>
    %136 = arith.maximumf %130, %135 : vector<8x256xf32>
    %c0_42 = arith.constant 0 : index
    %c1 = arith.constant 1 : index
    %c0_43 = arith.constant 0 : index
    %c0_44 = arith.constant 0 : index
    %137 = vector.load %arg3[%c0_42, %c1, %c0_43, %c0_44] : memref<1x4x8x256xf32, #tpu.memory_space<vmem>>, vector<1x1x8x256xf32>
    %138 = vector.shape_cast %137 : vector<1x1x8x256xf32> to vector<8x256xf32>
    %139 = vector.shape_cast %136 : vector<8x256xf32> to vector<1x1x8x256xf32>
    tpu.vector_store %arg3[%c0_42, %c1, %c0_43, %c0_44], %139 {strides = array<i32>} : memref<1x4x8x256xf32, #tpu.memory_space<vmem>>, vector<1x1x8x256xf32>,
    %c240_i32_45 = arith.constant 240 : i32
    %140 = tpu.dynamic_rotate %136 by %c240_i32_45 dim 1 : vector<8x256xf32>, i32 -> vector<8x256xf32>
    %cst_46 = arith.constant 0xFF800000 : f32
    %141 = vector.shape_cast %23 : vector<1x256xi1> to vector<1x256xi1>
    %142 = vector.broadcast %141 : vector<1x256xi1> to vector<8x256xi1>
    %143 = vector.broadcast %cst_46 : f32 to vector<8x256xf32>
    %144 = arith.select %142, %140, %143 : vector<8x256xi1>, vector<8x256xf32>
    %145 = arith.maximumf %136, %144 : vector<8x256xf32>
    %c16_i32_47 = arith.constant 16 : i32
    %146 = tpu.dynamic_rotate %136 by %c16_i32_47 dim 1 : vector<8x256xf32>, i32 -> vector<8x256xf32>
    %cst_48 = arith.constant 0xFF800000 : f32
    %147 = vector.shape_cast %25 : vector<1x256xi1> to vector<1x256xi1>
    %148 = vector.broadcast %147 : vector<1x256xi1> to vector<8x256xi1>
    %149 = vector.broadcast %cst_48 : f32 to vector<8x256xf32>
    %150 = arith.select %148, %146, %149 : vector<8x256xi1>, vector<8x256xf32>
    %151 = arith.maximumf %145, %150 : vector<8x256xf32>
    %c224_i32_49 = arith.constant 224 : i32
    %152 = tpu.dynamic_rotate %136 by %c224_i32_49 dim 1 : vector<8x256xf32>, i32 -> vector<8x256xf32>
    %cst_50 = arith.constant 0xFF800000 : f32
    %153 = vector.shape_cast %27 : vector<1x256xi1> to vector<1x256xi1>
    %154 = vector.broadcast %153 : vector<1x256xi1> to vector<8x256xi1>
    %155 = vector.broadcast %cst_50 : f32 to vector<8x256xf32>
    %156 = arith.select %154, %152, %155 : vector<8x256xi1>, vector<8x256xf32>
    %157 = arith.maximumf %151, %156 : vector<8x256xf32>
    %c32_i32_51 = arith.constant 32 : i32
    %158 = tpu.dynamic_rotate %136 by %c32_i32_51 dim 1 : vector<8x256xf32>, i32 -> vector<8x256xf32>
    %cst_52 = arith.constant 0xFF800000 : f32
    %159 = vector.shape_cast %29 : vector<1x256xi1> to vector<1x256xi1>
    %160 = vector.broadcast %159 : vector<1x256xi1> to vector<8x256xi1>
    %161 = vector.broadcast %cst_52 : f32 to vector<8x256xf32>
    %162 = arith.select %160, %158, %161 : vector<8x256xi1>, vector<8x256xf32>
    %163 = arith.maximumf %157, %162 : vector<8x256xf32>
    %c255_i32_53 = arith.constant 255 : i32
    %164 = tpu.dynamic_rotate %163 by %c255_i32_53 dim 1 : vector<8x256xf32>, i32 -> vector<8x256xf32>
    %cst_54 = arith.constant 0xFF800000 : f32
    %165 = vector.shape_cast %31 : vector<1x256xi1> to vector<1x256xi1>
    %166 = vector.broadcast %165 : vector<1x256xi1> to vector<8x256xi1>
    %167 = vector.broadcast %cst_54 : f32 to vector<8x256xf32>
    %168 = arith.select %166, %164, %167 : vector<8x256xi1>, vector<8x256xf32>
    %169 = arith.maximumf %163, %168 : vector<8x256xf32>
    %c1_i32_55 = arith.constant 1 : i32
    %170 = tpu.dynamic_rotate %163 by %c1_i32_55 dim 1 : vector<8x256xf32>, i32 -> vector<8x256xf32>
    %cst_56 = arith.constant 0xFF800000 : f32
    %171 = vector.shape_cast %33 : vector<1x256xi1> to vector<1x256xi1>
    %172 = vector.broadcast %171 : vector<1x256xi1> to vector<8x256xi1>
    %173 = vector.broadcast %cst_56 : f32 to vector<8x256xf32>
    %174 = arith.select %172, %170, %173 : vector<8x256xi1>, vector<8x256xf32>
    %175 = arith.maximumf %169, %174 : vector<8x256xf32>
    %c254_i32_57 = arith.constant 254 : i32
    %176 = tpu.dynamic_rotate %163 by %c254_i32_57 dim 1 : vector<8x256xf32>, i32 -> vector<8x256xf32>
    %cst_58 = arith.constant 0xFF800000 : f32
    %177 = vector.shape_cast %35 : vector<1x256xi1> to vector<1x256xi1>
    %178 = vector.broadcast %177 : vector<1x256xi1> to vector<8x256xi1>
    %179 = vector.broadcast %cst_58 : f32 to vector<8x256xf32>
    %180 = arith.select %178, %176, %179 : vector<8x256xi1>, vector<8x256xf32>
    %181 = arith.maximumf %175, %180 : vector<8x256xf32>
    %c2_i32_59 = arith.constant 2 : i32
    %182 = tpu.dynamic_rotate %163 by %c2_i32_59 dim 1 : vector<8x256xf32>, i32 -> vector<8x256xf32>
    %cst_60 = arith.constant 0xFF800000 : f32
    %183 = vector.shape_cast %37 : vector<1x256xi1> to vector<1x256xi1>
    %184 = vector.broadcast %183 : vector<1x256xi1> to vector<8x256xi1>
    %185 = vector.broadcast %cst_60 : f32 to vector<8x256xf32>
    %186 = arith.select %184, %182, %185 : vector<8x256xi1>, vector<8x256xf32>
    %187 = arith.maximumf %181, %186 : vector<8x256xf32>
    %c0_61 = arith.constant 0 : index
    %c0_62 = arith.constant 0 : index
    %c0_63 = arith.constant 0 : index
    %c0_64 = arith.constant 0 : index
    %188 = vector.load %arg3[%c0_61, %c0_62, %c0_63, %c0_64] : memref<1x4x8x256xf32, #tpu.memory_space<vmem>>, vector<1x1x8x256xf32>
    %189 = vector.shape_cast %188 : vector<1x1x8x256xf32> to vector<8x256xf32>
    %190 = vector.shape_cast %187 : vector<8x256xf32> to vector<1x1x8x256xf32>
    tpu.vector_store %arg3[%c0_61, %c0_62, %c0_63, %c0_64], %190 {strides = array<i32>} : memref<1x4x8x256xf32, #tpu.memory_space<vmem>>, vector<1x1x8x256xf32>,
    return
  }
  func.func @transform_0(%arg0: i32, %arg1: i32) -> (i32, i32, i32) {
    %c0_i32 = arith.constant 0 : i32
    %c0_i32_0 = arith.constant 0 : i32
    return %arg0, %arg1, %c0_i32 : i32, i32, i32
  }
  func.func @transform_1(%arg0: i32, %arg1: i32) -> (i32, i32, i32, i32) {
    %c0_i32 = arith.constant 0 : i32
    %c0_i32_0 = arith.constant 0 : i32
    %c0_i32_1 = arith.constant 0 : i32
    return %arg0, %c0_i32, %arg1, %c0_i32_0 : i32, i32, i32, i32
  }
}

</mosaic_0001>

<llo_original>
// kernel: spp.1
$region0: #{spp.1}
  #allocation0 [shape = 'u32[]', space=smem, size = 0x4, offset = 0x4, fixed_abs, tag = 'smem constant byte address 0x4 - core index']
  #allocation1 [shape = 'u32[144,128]{1,0:T(1,128)}', space=vmem, size = 0x12000, scoped, tag = 'internal scratch']
  %s0 = inlined_call_operand.vmem [shape: f32[2,8,256], index: 0, kind: input, shape index: {}]
  %s1 = inlined_call_operand.vmem [shape: f32[2,4,8,256], index: 1, kind: output, shape index: {}]
  %s2 = sld [smem:[#allocation0]]
  $region37: #{spp.1} parent=0
    _
  %s4 = ssub.s32 1, %s2
  %s5 = scalar_select 0, %s4, %s2
  loop: start=0, step=1, limit=4
  $region2: #{spp.1} parent=0 // loop_pre_header
    _
  $region3: #{spp.1} parent=0 // loop_header
    %s7 = sphi 0, %s11
    %p8 = scmp.ge.s32.totalorder %s7, 4
    %s14 = sphi 0, %s26
    %s15 = sphi 0, %s22
    %s16 = sphi 0, %s14
    %s17 = sphi 0, %s15
    %s18 = sphi 0, %s16
    %s19 = sphi 0, %s17
    %s31 = sphi 0, %s33
    %s34 = sphi 0, %s31
    %s35 = sphi 0, %s34
    %s51 = sphi 0, %s35
    %s59 = sphi 0, %s61
    %s62 = sphi 0, %s59
    %s63 = sphi 0, %s62
    %s79 = sphi 0, %s63
  $region4: #{spp.1} parent=0 // loop_header_branch
    %10 = sbr.rel (%p8) target = $region8
  $region5: #{spp.1} parent=0 // loop_body
    %s12 = ssub.s32 %s7, 1
    %s13 = ssub.s32 %s7, 2
    %s20 = sadd.s32 1, %s15
    %p21 = scmp.ge.s32.totalorder %s20, 1
    %s22 = scalar_select %p21, 0, %s20
    %s23 = sadd.s32 1, %s14
    %s24 = scalar_select %p21, %s23, %s14
    %p25 = scmp.ge.s32.totalorder %s24, 2
    %s26 = scalar_select %p25, 0, %s24
    %s27 = ssub.s32 %s14, %s26
    %s28 = ssub.s32 %s15, %s22
    %s29 = sor.u32 %s27, %s28
    %p30 = scmp.eq.s32.totalorder %s29, 0
    %s32 = sadd.s32 %s31, 1
    %s33 = scalar_select %p30, %s31, %s32
    %p36 = pneg %p30
    %p37 = scmp.eq.s32.totalorder %s7, 1
    %p38 = por %p36, %p37
    %p39 = scmp.ne.s32.totalorder %s31, %s34
    %p40 = scmp.eq.s32.totalorder %s7, 0
    %p41 = por %p39, %p40
    %p42 = scmp.ne.s32.totalorder %s31, %s34
    %p43 = scmp.eq.s32.totalorder %s12, 1
    %p44 = por %p42, %p43
    %p45 = scmp.ne.s32.totalorder %s34, %s35
    %p46 = scmp.eq.s32.totalorder %s12, 0
    %p47 = por %p45, %p46
    %p48 = scmp.ne.s32.totalorder %s34, %s35
    %p49 = scmp.eq.s32.totalorder %s13, 1
    %p50 = por %p48, %p49
    %p52 = scmp.ne.s32.totalorder %s35, %s51
    %p53 = scmp.eq.s32.totalorder %s13, 0
    %p54 = por %p52, %p53
    %s55 = ssub.s32 %s14, %s26
    %s56 = ssub.s32 %s15, %s22
    %s57 = sor.u32 %s55, %s56
    %p58 = scmp.eq.s32.totalorder %s57, 0
    %s60 = sadd.s32 %s59, 1
    %s61 = scalar_select %p58, %s59, %s60
    %p64 = pneg %p58
    %p65 = scmp.eq.s32.totalorder %s7, 1
    %p66 = por %p64, %p65
    %p67 = scmp.ne.s32.totalorder %s59, %s62
    %p68 = scmp.eq.s32.totalorder %s7, 0
    %p69 = por %p67, %p68
    %p70 = scmp.ne.s32.totalorder %s59, %s62
    %p71 = scmp.eq.s32.totalorder %s12, 1
    %p72 = por %p70, %p71
    %p73 = scmp.ne.s32.totalorder %s62, %s63
    %p74 = scmp.eq.s32.totalorder %s12, 0
    %p75 = por %p73, %p74
    %p76 = scmp.ne.s32.totalorder %s62, %s63
    %p77 = scmp.eq.s32.totalorder %s13, 1
    %p78 = por %p76, %p77
    %p80 = scmp.ne.s32.totalorder %s63, %s79
    %p81 = scmp.eq.s32.totalorder %s13, 0
    %p82 = por %p80, %p81
    %p83 = scmp.le.s32.totalorder 1, %s7
    %p84 = scmp.lt.s32.totalorder %s7, 3
    %p85 = pnand %p83, %p84
    %p86 = pneg %p85
    // Predicated region
    $region9: #{spp.1} parent=5 // pred_check
      _
    $region10: #{spp.1} parent=5 // pred_check_branch
      %88 = sbr.rel (%p85) target = $region12
    $region11: #{spp.1} parent=5 // pred_region
      %s89 = ssub.s32 %s7, 1
    $region12: #{spp.1} parent=5 // pred_fallthru
      _
    %p90 = scmp.lt.s32.totalorder %s7, 2
    // Predicated region
    $region13: #{spp.1} parent=5 // pred_check
      %p91 = pneg %p90
    $region14: #{spp.1} parent=5 // pred_check_branch
      %93 = sbr.rel (%p91) target = $region16
    $region15: #{spp.1} parent=5 // pred_region
      // Predicated region
      $region17: #{spp.1} parent=15 // pred_check
        %p94 = pneg %p41
      $region18: #{spp.1} parent=15 // pred_check_branch
        %96 = sbr.rel (%p94) target = $region20
      $region19: #{spp.1} parent=15 // pred_region
        %p97 = scmp.lt.s32.totalorder %s14, 1
        %s98 = scalar_select %p97, %s14, 1
        %p99 = scmp.lt.s32.totalorder %s15, 0
        %s100 = scalar_select %p99, %s15, 0
        %s101 = smul.addr %s100, 2
        %s102 = smul.addr %s98, 2
        %s103 = sadd.s32 %s101, %s102
        %s104 = smul.addr %s103, 8
        %s105 = scalar_lea.vmem %s0, %s104
      $region20: #{spp.1} parent=15 // pred_fallthru
        _
    $region16: #{spp.1} parent=5 // pred_fallthru
      _
    %p106 = scmp.le.s32.totalorder 1, %s7
    %p107 = scmp.lt.s32.totalorder %s7, 3
    %p108 = pnand %p106, %p107
    %p109 = pneg %p108
    // Predicated region
    $region21: #{spp.1} parent=5 // pred_check
      _
    $region22: #{spp.1} parent=5 // pred_check_branch
      %111 = sbr.rel (%p108) target = $region24
    $region23: #{spp.1} parent=5 // pred_region
      %s112 = ssub.s32 %s7, 1
      %p113 = scmp.lt.s32.totalorder %s16, 1
      %s114 = scalar_select %p113, %s16, 1
      %p115 = scmp.lt.s32.totalorder %s17, 0
      %s116 = scalar_select %p115, %s17, 0
      %s117 = smul.addr %s116, 2
      %s118 = smul.addr %s114, 2
      %s119 = sadd.s32 %s117, %s118
      %s120 = smul.addr %s119, 8
      %s121 = scalar_lea.vmem %s0, %s120
      %p122 = pneg %p47
      %p123 = pneg %p44
      %p124 = pneg %p75
      %p125 = pneg %p72
      %p126 = scmp.lt.s32.totalorder %s16, 1
      %s127 = scalar_select %p126, %s16, 1
      %p128 = scmp.lt.s32.totalorder %s17, 0
      %s129 = scalar_select %p128, %s17, 0
      %s130 = smul.addr %s129, 2
      %s131 = smul.addr %s127, 8
      %s132 = sadd.s32 %s130, %s131
      %s133 = smul.addr %s132, 8
      %s134 = scalar_lea.vmem %s1, %s133
      %p135 = scmp.lt.s32.totalorder %s16, 1
      %s136 = scalar_select %p135, %s16, 1
      %p137 = scmp.lt.s32.totalorder %s17, 0
      %s138 = scalar_select %p137, %s17, 0
      %s139 = smul.addr %s138, 2
      %s140 = smul.addr %s136, 2
      %s141 = sadd.s32 %s139, %s140
      %s142 = smul.addr %s141, 8
      %s143 = scalar_lea.vmem %s0, %s142
      %p144 = scmp.lt.s32.totalorder %s16, 1
      %s145 = scalar_select %p144, %s16, 1
      %p146 = scmp.lt.s32.totalorder %s17, 0
      %s147 = scalar_select %p146, %s17, 0
      %s148 = smul.addr %s147, 2
      %s149 = smul.addr %s145, 8
      %s150 = sadd.s32 %s148, %s149
      %s151 = smul.addr %s150, 8
      %s152 = scalar_lea.vmem %s1, %s151
      %v153 = vld [vmem:[%s143] sm:$0xff]
      %v154 = vld [vmem:[%s143 + $0x8] sm:$0xff]
      %s155 = scalar_lea.vmem %s152, 48
      %156 = vst [vmem:[%s155] sm:$0xff] %v153
      %157 = vst [vmem:[%s155 + $0x8] sm:$0xff] %v154
      %v158 = vlaneseq
      %v159 = vand.u32 %v158, 127
      %v160 = vadd.s32 %v159, 128
      %vm161 = vcmp.lt.s32.totalorder %v159, 0
      %v162 = vsub.s32 0, %v159
      %v163 = vsel %vm161, %v162, %v159
      %v164 = vshrl.u32 %v163, 4
      %v165 = vand.u32 %v163, 15
      %v166 = vsub.s32 0, %v165
      %v167 = vsel %vm161, %v166, %v165
      %vm168 = vcmp.lt.s32.totalorder %v160, 0
      %v169 = vsub.s32 0, %v160
      %v170 = vsel %vm168, %v169, %v160
      %v171 = vshrl.u32 %v170, 4
      %v172 = vand.u32 %v170, 15
      %v173 = vsub.s32 0, %v172
      %v174 = vsel %vm168, %v173, %v172
      %vm175 = vcmp.ne.s32.totalorder %v167, 0
      %vm176 = vcmp.ne.s32.totalorder %v174, 0
      %vm177 = vcmp.lt.s32.totalorder %v167, 0
      %vm178 = vcmp.lt.s32.totalorder %v174, 0
      %vm179 = vmand %vm177, %vm175
      %vm180 = vmand %vm178, %vm176
      %v181 = vadd.s32 %v167, 16
      %v182 = vadd.s32 %v174, 16
      %v183 = vsel %vm179, %v181, %v167
      %v184 = vsel %vm180, %v182, %v174
      %vm185 = vcmp.lt.s32.totalorder %v159, 240
      %vm186 = vcmp.lt.s32.totalorder %v160, 240
      %vm187 = vcmp.ge.s32.totalorder %v159, 16
      %vm188 = vcmp.ge.s32.totalorder %v160, 16
      %vm189 = vcmp.lt.s32.totalorder %v159, 224
      %vm190 = vcmp.lt.s32.totalorder %v160, 224
      %vm191 = vcmp.ge.s32.totalorder %v159, 32
      %vm192 = vcmp.ge.s32.totalorder %v160, 32
      %vm193 = vcmp.lt.s32.totalorder %v183, 15
      %vm194 = vcmp.lt.s32.totalorder %v184, 15
      %vm195 = vcmp.ge.s32.totalorder %v183, 1
      %vm196 = vcmp.ge.s32.totalorder %v184, 1
      %vm197 = vcmp.lt.s32.totalorder %v183, 14
      %vm198 = vcmp.lt.s32.totalorder %v184, 14
      %vm199 = vcmp.ge.s32.totalorder %v183, 2
      %vm200 = vcmp.ge.s32.totalorder %v184, 2
      %201 = vrot.lane.b32.xlu0 %v153, 112
      %v202 = vpop.permute.xlu0 %201
      %203 = vrot.lane.b32.xlu0 %v154, 112
      %v204 = vpop.permute.xlu0 %203
      %vm205 = vcmp.lt.s32.totalorder %v159, 112
      %v206 = vsel %vm205, %v202, %v204
      %v207 = vsel %vm205, %v204, %v202
      %v208 = vsel %vm185, 1, 0
      %v209 = vsel %vm186, 1, 0
      %vm210 = vcmp.eq.s32.totalorder %v208, 1
      %vm211 = vcmp.eq.s32.totalorder %v209, 1
      %v212 = vsel %vm210, %v206, -inf
      %v213 = vsel %vm211, %v207, -inf
      %v214 = vmax.f32 %v153, %v212
      %v215 = vmax.f32 %v154, %v213
      %216 = vrot.lane.b32.xlu0 %v153, 16
      %v217 = vpop.permute.xlu0 %216
      %218 = vrot.lane.b32.xlu0 %v154, 16
      %v219 = vpop.permute.xlu0 %218
      %vm220 = vcmp.lt.s32.totalorder %v159, 16
      %v221 = vsel %vm220, %v217, %v219
      %v222 = vsel %vm220, %v219, %v217
      %v223 = vsel %vm187, 1, 0
      %v224 = vsel %vm188, 1, 0
      %vm225 = vcmp.eq.s32.totalorder %v223, 1
      %vm226 = vcmp.eq.s32.totalorder %v224, 1
      %v227 = vsel %vm225, %v222, -inf
      %v228 = vsel %vm226, %v221, -inf
      %v229 = vmax.f32 %v214, %v227
      %v230 = vmax.f32 %v215, %v228
      %231 = vrot.lane.b32.xlu0 %v153, 96
      %v232 = vpop.permute.xlu0 %231
      %233 = vrot.lane.b32.xlu0 %v154, 96
      %v234 = vpop.permute.xlu0 %233
      %vm235 = vcmp.lt.s32.totalorder %v159, 96
      %v236 = vsel %vm235, %v232, %v234
      %v237 = vsel %vm235, %v234, %v232
      %v238 = vsel %vm189, 1, 0
      %v239 = vsel %vm190, 1, 0
      %vm240 = vcmp.eq.s32.totalorder %v238, 1
      %vm241 = vcmp.eq.s32.totalorder %v239, 1
      %v242 = vsel %vm240, %v236, -inf
      %v243 = vsel %vm241, %v237, -inf
      %v244 = vmax.f32 %v229, %v242
      %v245 = vmax.f32 %v230, %v243
      %246 = vrot.lane.b32.xlu0 %v153, 32
      %v247 = vpop.permute.xlu0 %246
      %248 = vrot.lane.b32.xlu0 %v154, 32
      %v249 = vpop.permute.xlu0 %248
      %vm250 = vcmp.lt.s32.totalorder %v159, 32
      %v251 = vsel %vm250, %v247, %v249
      %v252 = vsel %vm250, %v249, %v247
      %v253 = vsel %vm191, 1, 0
      %v254 = vsel %vm192, 1, 0
      %vm255 = vcmp.eq.s32.totalorder %v253, 1
      %vm256 = vcmp.eq.s32.totalorder %v254, 1
      %v257 = vsel %vm255, %v252, -inf
      %v258 = vsel %vm256, %v251, -inf
      %v259 = vmax.f32 %v244, %v257
      %v260 = vmax.f32 %v245, %v258
      %261 = vrot.lane.b32.xlu0 %v259, 127
      %v262 = vpop.permute.xlu0 %261
      %263 = vrot.lane.b32.xlu0 %v260, 127
      %v264 = vpop.permute.xlu0 %263
      %vm265 = vcmp.lt.s32.totalorder %v159, 127
      %v266 = vsel %vm265, %v262, %v264
      %v267 = vsel %vm265, %v264, %v262
      %v268 = vsel %vm193, 1, 0
      %v269 = vsel %vm194, 1, 0
      %vm270 = vcmp.eq.s32.totalorder %v268, 1
      %vm271 = vcmp.eq.s32.totalorder %v269, 1
      %v272 = vsel %vm270, %v266, -inf
      %v273 = vsel %vm271, %v267, -inf
      %v274 = vmax.f32 %v259, %v272
      %v275 = vmax.f32 %v260, %v273
      %276 = vrot.lane.b32.xlu0 %v259, 1
      %v277 = vpop.permute.xlu0 %276
      %278 = vrot.lane.b32.xlu0 %v260, 1
      %v279 = vpop.permute.xlu0 %278
      %vm280 = vcmp.lt.s32.totalorder %v159, 1
      %v281 = vsel %vm280, %v277, %v279
      %v282 = vsel %vm280, %v279, %v277
      %v283 = vsel %vm195, 1, 0
      %v284 = vsel %vm196, 1, 0
      %vm285 = vcmp.eq.s32.totalorder %v283, 1
      %vm286 = vcmp.eq.s32.totalorder %v284, 1
      %v287 = vsel %vm285, %v282, -inf
      %v288 = vsel %vm286, %v281, -inf
      %v289 = vmax.f32 %v274, %v287
      %v290 = vmax.f32 %v275, %v288
      %291 = vrot.lane.b32.xlu0 %v259, 126
      %v292 = vpop.permute.xlu0 %291
      %293 = vrot.lane.b32.xlu0 %v260, 126
      %v294 = vpop.permute.xlu0 %293
      %vm295 = vcmp.lt.s32.totalorder %v159, 126
      %v296 = vsel %vm295, %v292, %v294
      %v297 = vsel %vm295, %v294, %v292
      %v298 = vsel %vm197, 1, 0
      %v299 = vsel %vm198, 1, 0
      %vm300 = vcmp.eq.s32.totalorder %v298, 1
      %vm301 = vcmp.eq.s32.totalorder %v299, 1
      %v302 = vsel %vm300, %v296, -inf
      %v303 = vsel %vm301, %v297, -inf
      %v304 = vmax.f32 %v289, %v302
      %v305 = vmax.f32 %v290, %v303
      %306 = vrot.lane.b32.xlu0 %v259, 2
      %v307 = vpop.permute.xlu0 %306
      %308 = vrot.lane.b32.xlu0 %v260, 2
      %v309 = vpop.permute.xlu0 %308
      %vm310 = vcmp.lt.s32.totalorder %v159, 2
      %v311 = vsel %vm310, %v307, %v309
      %v312 = vsel %vm310, %v309, %v307
      %v313 = vsel %vm199, 1, 0
      %v314 = vsel %vm200, 1, 0
      %vm315 = vcmp.eq.s32.totalorder %v313, 1
      %vm316 = vcmp.eq.s32.totalorder %v314, 1
      %v317 = vsel %vm315, %v312, -inf
      %v318 = vsel %vm316, %v311, -inf
      %v319 = vmax.f32 %v304, %v317
      %v320 = vmax.f32 %v305, %v318
      %s321 = scalar_lea.vmem %s152, 32
      %322 = vst [vmem:[%s321] sm:$0xff] %v319
      %323 = vst [vmem:[%s321 + $0x8] sm:$0xff] %v320
      %324 = vrot.lane.b32.xlu0 %v319, 112
      %v325 = vpop.permute.xlu0 %324
      %326 = vrot.lane.b32.xlu0 %v320, 112
      %v327 = vpop.permute.xlu0 %326
      %v328 = vsel %vm205, %v325, %v327
      %v329 = vsel %vm205, %v327, %v325
      %v330 = vsel %vm210, %v328, -inf
      %v331 = vsel %vm211, %v329, -inf
      %v332 = vmax.f32 %v319, %v330
      %v333 = vmax.f32 %v320, %v331
      %334 = vrot.lane.b32.xlu0 %v319, 16
      %v335 = vpop.permute.xlu0 %334
      %336 = vrot.lane.b32.xlu0 %v320, 16
      %v337 = vpop.permute.xlu0 %336
      %v338 = vsel %vm220, %v335, %v337
      %v339 = vsel %vm220, %v337, %v335
      %v340 = vsel %vm225, %v339, -inf
      %v341 = vsel %vm226, %v338, -inf
      %v342 = vmax.f32 %v332, %v340
      %v343 = vmax.f32 %v333, %v341
      %344 = vrot.lane.b32.xlu0 %v319, 96
      %v345 = vpop.permute.xlu0 %344
      %346 = vrot.lane.b32.xlu0 %v320, 96
      %v347 = vpop.permute.xlu0 %346
      %v348 = vsel %vm235, %v345, %v347
      %v349 = vsel %vm235, %v347, %v345
      %v350 = vsel %vm240, %v348, -inf
      %v351 = vsel %vm241, %v349, -inf
      %v352 = vmax.f32 %v342, %v350
      %v353 = vmax.f32 %v343, %v351
      %354 = vrot.lane.b32.xlu0 %v319, 32
      %v355 = vpop.permute.xlu0 %354
      %356 = vrot.lane.b32.xlu0 %v320, 32
      %v357 = vpop.permute.xlu0 %356
      %v358 = vsel %vm250, %v355, %v357
      %v359 = vsel %vm250, %v357, %v355
      %v360 = vsel %vm255, %v359, -inf
      %v361 = vsel %vm256, %v358, -inf
      %v362 = vmax.f32 %v352, %v360
      %v363 = vmax.f32 %v353, %v361
      %364 = vrot.lane.b32.xlu0 %v362, 127
      %v365 = vpop.permute.xlu0 %364
      %366 = vrot.lane.b32.xlu0 %v363, 127
      %v367 = vpop.permute.xlu0 %366
      %v368 = vsel %vm265, %v365, %v367
      %v369 = vsel %vm265, %v367, %v365
      %v370 = vsel %vm270, %v368, -inf
      %v371 = vsel %vm271, %v369, -inf
      %v372 = vmax.f32 %v362, %v370
      %v373 = vmax.f32 %v363, %v371
      %374 = vrot.lane.b32.xlu0 %v362, 1
      %v375 = vpop.permute.xlu0 %374
      %376 = vrot.lane.b32.xlu0 %v363, 1
      %v377 = vpop.permute.xlu0 %376
      %v378 = vsel %vm280, %v375, %v377
      %v379 = vsel %vm280, %v377, %v375
      %v380 = vsel %vm285, %v379, -inf
      %v381 = vsel %vm286, %v378, -inf
      %v382 = vmax.f32 %v372, %v380
      %v383 = vmax.f32 %v373, %v381
      %384 = vrot.lane.b32.xlu0 %v362, 126
      %v385 = vpop.permute.xlu0 %384
      %386 = vrot.lane.b32.xlu0 %v363, 126
      %v387 = vpop.permute.xlu0 %386
      %v388 = vsel %vm295, %v385, %v387
      %v389 = vsel %vm295, %v387, %v385
      %v390 = vsel %vm300, %v388, -inf
      %v391 = vsel %vm301, %v389, -inf
      %v392 = vmax.f32 %v382, %v390
      %v393 = vmax.f32 %v383, %v391
      %394 = vrot.lane.b32.xlu0 %v362, 2
      %v395 = vpop.permute.xlu0 %394
      %396 = vrot.lane.b32.xlu0 %v363, 2
      %v397 = vpop.permute.xlu0 %396
      %v398 = vsel %vm310, %v395, %v397
      %v399 = vsel %vm310, %v397, %v395
      %v400 = vsel %vm315, %v399, -inf
      %v401 = vsel %vm316, %v398, -inf
      %v402 = vmax.f32 %v392, %v400
      %v403 = vmax.f32 %v393, %v401
      %s404 = scalar_lea.vmem %s152, 16
      %405 = vst [vmem:[%s404] sm:$0xff] %v402
      %406 = vst [vmem:[%s404 + $0x8] sm:$0xff] %v403
      %407 = vrot.lane.b32.xlu0 %v402, 112
      %v408 = vpop.permute.xlu0 %407
      %409 = vrot.lane.b32.xlu0 %v403, 112
      %v410 = vpop.permute.xlu0 %409
      %v411 = vsel %vm205, %v408, %v410
      %v412 = vsel %vm205, %v410, %v408
      %v413 = vsel %vm210, %v411, -inf
      %v414 = vsel %vm211, %v412, -inf
      %v415 = vmax.f32 %v402, %v413
      %v416 = vmax.f32 %v403, %v414
      %417 = vrot.lane.b32.xlu0 %v402, 16
      %v418 = vpop.permute.xlu0 %417
      %419 = vrot.lane.b32.xlu0 %v403, 16
      %v420 = vpop.permute.xlu0 %419
      %v421 = vsel %vm220, %v418, %v420
      %v422 = vsel %vm220, %v420, %v418
      %v423 = vsel %vm225, %v422, -inf
      %v424 = vsel %vm226, %v421, -inf
      %v425 = vmax.f32 %v415, %v423
      %v426 = vmax.f32 %v416, %v424
      %427 = vrot.lane.b32.xlu0 %v402, 96
      %v428 = vpop.permute.xlu0 %427
      %429 = vrot.lane.b32.xlu0 %v403, 96
      %v430 = vpop.permute.xlu0 %429
      %v431 = vsel %vm235, %v428, %v430
      %v432 = vsel %vm235, %v430, %v428
      %v433 = vsel %vm240, %v431, -inf
      %v434 = vsel %vm241, %v432, -inf
      %v435 = vmax.f32 %v425, %v433
      %v436 = vmax.f32 %v426, %v434
      %437 = vrot.lane.b32.xlu0 %v402, 32
      %v438 = vpop.permute.xlu0 %437
      %439 = vrot.lane.b32.xlu0 %v403, 32
      %v440 = vpop.permute.xlu0 %439
      %v441 = vsel %vm250, %v438, %v440
      %v442 = vsel %vm250, %v440, %v438
      %v443 = vsel %vm255, %v442, -inf
      %v444 = vsel %vm256, %v441, -inf
      %v445 = vmax.f32 %v435, %v443
      %v446 = vmax.f32 %v436, %v444
      %447 = vrot.lane.b32.xlu0 %v445, 127
      %v448 = vpop.permute.xlu0 %447
      %449 = vrot.lane.b32.xlu0 %v446, 127
      %v450 = vpop.permute.xlu0 %449
      %v451 = vsel %vm265, %v448, %v450
      %v452 = vsel %vm265, %v450, %v448
      %v453 = vsel %vm270, %v451, -inf
      %v454 = vsel %vm271, %v452, -inf
      %v455 = vmax.f32 %v445, %v453
      %v456 = vmax.f32 %v446, %v454
      %457 = vrot.lane.b32.xlu0 %v445, 1
      %v458 = vpop.permute.xlu0 %457
      %459 = vrot.lane.b32.xlu0 %v446, 1
      %v460 = vpop.permute.xlu0 %459
      %v461 = vsel %vm280, %v458, %v460
      %v462 = vsel %vm280, %v460, %v458
      %v463 = vsel %vm285, %v462, -inf
      %v464 = vsel %vm286, %v461, -inf
      %v465 = vmax.f32 %v455, %v463
      %v466 = vmax.f32 %v456, %v464
      %467 = vrot.lane.b32.xlu0 %v445, 126
      %v468 = vpop.permute.xlu0 %467
      %469 = vrot.lane.b32.xlu0 %v446, 126
      %v470 = vpop.permute.xlu0 %469
      %v471 = vsel %vm295, %v468, %v470
      %v472 = vsel %vm295, %v470, %v468
      %v473 = vsel %vm300, %v471, -inf
      %v474 = vsel %vm301, %v472, -inf
      %v475 = vmax.f32 %v465, %v473
      %v476 = vmax.f32 %v466, %v474
      %477 = vrot.lane.b32.xlu0 %v445, 2
      %v478 = vpop.permute.xlu0 %477
      %479 = vrot.lane.b32.xlu0 %v446, 2
      %v480 = vpop.permute.xlu0 %479
      %v481 = vsel %vm310, %v478, %v480
      %v482 = vsel %vm310, %v480, %v478
      %v483 = vsel %vm315, %v482, -inf
      %v484 = vsel %vm316, %v481, -inf
      %v485 = vmax.f32 %v475, %v483
      %v486 = vmax.f32 %v476, %v484
      %487 = vst [vmem:[%s152] sm:$0xff] %v485
      %488 = vst [vmem:[%s152 + $0x8] sm:$0xff] %v486
      %p489 = scmp.lt.s32.totalorder %s16, 1
      %s490 = scalar_select %p489, %s16, 1
      %p491 = scmp.lt.s32.totalorder %s17, 0
      %s492 = scalar_select %p491, %s17, 0
      %s493 = smul.addr %s492, 2
      %s494 = smul.addr %s490, 8
      %s495 = sadd.s32 %s493, %s494
      %s496 = smul.addr %s495, 8
      %s497 = scalar_lea.vmem %s1, %s496
      // Predicated region
      $region25: #{spp.1} parent=23 // pred_check
        %p498 = pneg %p72
      $region26: #{spp.1} parent=23 // pred_check_branch
        %500 = sbr.rel (%p498) target = $region28
      $region27: #{spp.1} parent=23 // pred_region
        _
      $region28: #{spp.1} parent=23 // pred_fallthru
        _
    $region24: #{spp.1} parent=5 // pred_fallthru
      _
    %p501 = scmp.le.s32.totalorder 2, %s7
    // Predicated region
    $region29: #{spp.1} parent=5 // pred_check
      %p502 = pneg %p501
    $region30: #{spp.1} parent=5 // pred_check_branch
      %504 = sbr.rel (%p502) target = $region32
    $region31: #{spp.1} parent=5 // pred_region
      %s505 = ssub.s32 %s7, 2
      // Predicated region
      $region33: #{spp.1} parent=31 // pred_check
        %p506 = pneg %p78
      $region34: #{spp.1} parent=31 // pred_check_branch
        %508 = sbr.rel (%p506) target = $region36
      $region35: #{spp.1} parent=31 // pred_region
        %p509 = scmp.lt.s32.totalorder %s18, 1
        %s510 = scalar_select %p509, %s18, 1
        %p511 = scmp.lt.s32.totalorder %s19, 0
        %s512 = scalar_select %p511, %s19, 0
        %s513 = smul.addr %s512, 2
        %s514 = smul.addr %s510, 8
        %s515 = sadd.s32 %s513, %s514
        %s516 = smul.addr %s515, 8
        %s517 = scalar_lea.vmem %s1, %s516
      $region36: #{spp.1} parent=31 // pred_fallthru
        _
    $region32: #{spp.1} parent=5 // pred_fallthru
      _
  $region6: #{spp.1} parent=0 // loop_footer
    %s11 = sadd.s32 1, %s7
  $region7: #{spp.1} parent=0 // loop_footer_branch
    %6 = sbr.rel target = $region3
  $region8: #{spp.1} parent=0 // loop_exit
    _

</llo_original>
